<compile_context>
chip_gen: v5e
topology: v5e:2x2
jax: 0.10.0
libtpu: 0.0.40
codegen_flags: <defaults>
</compile_context>

<pallas_src>
import math

import jax
import jax.numpy as jnp
from jax import lax
from jax.experimental import pallas as pl
from jax.experimental.pallas import tpu as pltpu

_VMEM_TILE_BUDGET = 40 * 1024 * 1024     # conservative: fits v7x's 64 MiB VMEM
_VMEM_LIMIT_BYTES = 48 * 1024 * 1024     # scoped-VMEM cap (<= v7x physical)
_VMEM_TABLE_LIMIT = 2 * 1024 * 1024      # fast path: whole table in VMEM
_MAX_VOCAB_ONEHOT = 4096                 # fast path: keep one-hot tiles small
_MAX_TOKENS_PER_CALL = 16384             # SMEM scalar-prefetch size guard
_DMA_UNROLL = 8                          # descriptors issued per rolled iter


def _round_up(x: int, m: int) -> int:
    return (x + m - 1) // m * m


def _sublane_multiple(dtype) -> int:
    # Sublane packing: 8 rows for 4-byte, 16 for 2-byte, 32 for 1-byte dtypes.
    return max(8, 32 // jnp.dtype(dtype).itemsize)


def _choose_t_block(n_tokens: int, block_tokens: int, sub_mult: int,
                    d_model: int, itemsize: int) -> int:
    """Sublane-dense token-block size that fits VMEM and can feed 2 TCs."""
    t = _round_up(max(1, min(block_tokens, max(n_tokens, 1))), sub_mult)
    # Keep ~4 buffered (t, d_model) tiles under the (v7x-safe) VMEM budget.
    while t > sub_mult and 4 * t * d_model * itemsize > _VMEM_TILE_BUDGET:
        t = _round_up(t // 2, sub_mult)
    # Prefer a grid of >= 2 so the "parallel" axis can use both v7x TCs.
    if n_tokens > sub_mult:
        half = _round_up((n_tokens + 1) // 2, sub_mult)
        t = min(t, half)
    return max(t, sub_mult)


# ----------------------------------------------------------------------------
# Fast path: whole embedding table in VMEM, gather via one-hot @ table (MXU).
# ----------------------------------------------------------------------------
def _make_vmem_table_kernel(t_block: int, vocab_size: int, scale: float):
    def kernel(ids_ref, emb_ref, out_ref):
        ids = ids_ref[...]                                          # (T, 1) i32
        iota = lax.broadcasted_iota(jnp.int32, (t_block, vocab_size), 1)
        onehot = (ids == iota).astype(emb_ref.dtype)                # (T, V)
        rows = jnp.dot(onehot, emb_ref[...],
                       preferred_element_type=jnp.float32)          # (T, D) f32
        out_ref[...] = (rows * scale).astype(out_ref.dtype)
    return kernel


def _embed_vmem_table(flat_ids, table, scale: float, block_tokens: int):
    n = flat_ids.shape[0]
    vocab_size, d_model = table.shape
    itemsize = jnp.dtype(table.dtype).itemsize
    sub = _sublane_multiple(table.dtype)
    t_block = _choose_t_block(n, block_tokens, sub, d_model, itemsize)
    n_pad = _round_up(max(n, 1), t_block)

    ids = flat_ids
    if n_pad != n:
        ids = jnp.pad(ids, (0, n_pad - n))      # pad with id 0 (in bounds)
    ids2d = ids.reshape(n_pad, 1)

    grid_spec = pltpu.PrefetchScalarGridSpec(
        num_scalar_prefetch=0,
        grid=(n_pad // t_block,),
        in_specs=[
            pl.BlockSpec((t_block, 1), lambda i: (i, 0)),
            pl.BlockSpec((vocab_size, d_model), lambda i: (0, 0)),
        ],
        out_specs=pl.BlockSpec((t_block, d_model), lambda i: (i, 0)),
    )
    out = pl.pallas_call(
        _make_vmem_table_kernel(t_block, vocab_size, scale),
        grid_spec=grid_spec,
        out_shape=jax.ShapeDtypeStruct((n_pad, d_model), table.dtype),
        compiler_params=pltpu.CompilerParams(
            dimension_semantics=("parallel",),
            vmem_limit_bytes=_VMEM_LIMIT_BYTES,
        ),
    )(ids2d, table)
    if n_pad != n:
        out = out[:n]
    return out


# ----------------------------------------------------------------------------
# Gather path: table in HBM, per-row DMA gather straight into the output tile.
# ----------------------------------------------------------------------------
def _make_hbm_gather_kernel(t_block: int, scale: float, unroll: int):
    n_outer = t_block // unroll

    def kernel(ids_ref, emb_hbm, out_ref, sem):
        base = pl.program_id(0) * t_block

        # Issue all row gathers of this block straight into the output tile.
        # Partially unrolled: `unroll` descriptor pushes per scf.for iteration.
        @pl.loop(0, n_outer)
        def _issue(o):
            t0 = o * unroll
            for u in range(unroll):
                tok = ids_ref[base + t0 + u]
                pltpu.make_async_copy(emb_hbm.at[tok],
                                      out_ref.at[t0 + u],
                                      sem).start()

        # Drain: each wait retires one row-sized transfer.  All scalar id
        # reads already happened above (waits break SMEM sst->sld forwarding).
        @pl.loop(0, n_outer)
        def _drain(o):
            t0 = o * unroll
            for u in range(unroll):
                pltpu.make_async_copy(emb_hbm.at[0],
                                      out_ref.at[t0 + u],
                                      sem).wait()

        # Scale in place (f32 math for bf16 tables); the previous tile's
        # writeback overlaps with the next step's gather via the pipeline.
        out_ref[...] = (out_ref[...].astype(jnp.float32) * scale
                        ).astype(out_ref.dtype)

    return kernel


def _embed_hbm_gather(flat_ids, table, scale: float, block_tokens: int):
    n = flat_ids.shape[0]
    vocab_size, d_model = table.shape
    itemsize = jnp.dtype(table.dtype).itemsize
    sub = _sublane_multiple(table.dtype)
    t_block = _choose_t_block(n, block_tokens, sub, d_model, itemsize)
    n_pad = _round_up(max(n, 1), t_block)

    ids = flat_ids
    if n_pad != n:
        ids = jnp.pad(ids, (0, n_pad - n))      # pad with id 0 (in bounds)

    grid_spec = pltpu.PrefetchScalarGridSpec(
        num_scalar_prefetch=1,
        grid=(n_pad // t_block,),
        in_specs=[
            # Embedding table stays in HBM; rows are gathered manually via DMA.
            pl.BlockSpec(memory_space=pl.ANY),
        ],
        out_specs=pl.BlockSpec((t_block, d_model), lambda i, ids_ref: (i, 0)),
        scratch_shapes=[pltpu.SemaphoreType.DMA(())],
    )
    out = pl.pallas_call(
        _make_hbm_gather_kernel(t_block, scale, _DMA_UNROLL),
        grid_spec=grid_spec,
        out_shape=jax.ShapeDtypeStruct((n_pad, d_model), table.dtype),
        compiler_params=pltpu.CompilerParams(
            dimension_semantics=("parallel",),
            vmem_limit_bytes=_VMEM_LIMIT_BYTES,
        ),
    )(ids, table)
    if n_pad != n:
        out = out[:n]
    return out


# ----------------------------------------------------------------------------
# Public wrapper (matches InputEmbeddings.forward).
# ----------------------------------------------------------------------------
def input_embeddings(token_ids: jax.Array, embedding_table: jax.Array,
                     *, block_tokens: int = 256,
                     use_vmem_table: bool | None = None) -> jax.Array:
    """out = embedding_table[token_ids] * sqrt(d_model).

    token_ids:       int (batch, seq)
    embedding_table: (vocab_size, d_model)
    returns:         (batch, seq, d_model) in the embedding dtype
    """
    vocab_size, d_model = embedding_table.shape
    scale = math.sqrt(d_model)
    flat = token_ids.reshape(-1).astype(jnp.int32)
    n = flat.shape[0]

    table_bytes = vocab_size * d_model * jnp.dtype(embedding_table.dtype).itemsize
    if use_vmem_table is None:
        use_vmem_table = (table_bytes <= _VMEM_TABLE_LIMIT
                          and vocab_size <= _MAX_VOCAB_ONEHOT)

    if use_vmem_table:
        out_flat = _embed_vmem_table(flat, embedding_table, scale, block_tokens)
    elif n <= _MAX_TOKENS_PER_CALL:
        out_flat = _embed_hbm_gather(flat, embedding_table, scale, block_tokens)
    else:
        # Chunk so each call's scalar-prefetched id array stays within SMEM.
        parts = [
            _embed_hbm_gather(flat[s:s + _MAX_TOKENS_PER_CALL],
                              embedding_table, scale, block_tokens)
            for s in range(0, n, _MAX_TOKENS_PER_CALL)
        ]
        out_flat = jnp.concatenate(parts, axis=0)

    return out_flat.reshape(token_ids.shape + (d_model,))


if __name__ == "__main__":
    key = jax.random.PRNGKey(0)
    k1, k2, k3, k4 = jax.random.split(key, 4)

    # --- Test 1: small-table fast path (whole table resident in VMEM). ---
    batch, seq = 2, 8
    vocab_size, d_model = 64, 128
    table = jax.random.normal(k1, (vocab_size, d_model), dtype=jnp.float32)
    token_ids = jax.random.randint(k2, (batch, seq), 0, vocab_size,
                                   dtype=jnp.int32)
    out = jax.block_until_ready(input_embeddings(token_ids, table))
    ref = table[token_ids] * math.sqrt(d_model)
    assert out.shape == (batch, seq, d_model)
    assert jnp.allclose(out, ref, atol=1e-5, rtol=1e-5)

    # --- Test 2: HBM DMA-gather path (forced), several pipelined steps. ---
    batch2, seq2 = 2, 16
    vocab2, d_model2 = 512, 256
    table2 = jax.random.normal(k3, (vocab2, d_model2), dtype=jnp.float32)
    token_ids2 = jax.random.randint(k4, (batch2, seq2), 0, vocab2,
                                    dtype=jnp.int32)
    out2 = jax.block_until_ready(
        input_embeddings(token_ids2, table2, block_tokens=8,
                         use_vmem_table=False))
    ref2 = table2[token_ids2] * math.sqrt(d_model2)
    assert out2.shape == (batch2, seq2, d_model2)
    assert jnp.allclose(out2, ref2, atol=1e-5, rtol=1e-5)

    print("KERNEL_OK")
</pallas_src>

<mosaic_0001>
module attributes {stable_mosaic.version = 11 : i64} {
  func.func @kernel(%arg0: i32, %arg1: memref<8x1xi32, #tpu.memory_space<vmem>>, %arg2: memref<64x128xf32, #tpu.memory_space<vmem>>, %arg3: memref<8x128xf32, #tpu.memory_space<vmem>>) attributes {dimension_semantics = [#tpu.dimension_semantics<parallel>], iteration_bounds = array<i64: 2>, scalar_prefetch = 0 : i64, scratch_operands = 0 : i64, tpu.core_type = #tpu.core_type<tc>, window_params = [{transform_indices = @transform_0, window_bounds = array<i64: 8, 1>}, {pipeline_mode = #tpu.pipeline_mode<synchronous>, transform_indices = @transform_1, window_bounds = array<i64: 64, 128>}, {transform_indices = @transform_2, window_bounds = array<i64: 8, 128>}]} {
    %c0 = arith.constant 0 : index
    %c0_0 = arith.constant 0 : index
    %0 = vector.load %arg1[%c0, %c0_0] : memref<8x1xi32, #tpu.memory_space<vmem>>, vector<8x1xi32>
    %1 = tpu.iota {dimensions = array<i32: 1>} : vector<8x64xi32>
    %2 = vector.broadcast %0 : vector<8x1xi32> to vector<8x64xi32>
    %3 = arith.cmpi eq, %2, %1 : vector<8x64xi32>
    %4 = arith.extui %3 : vector<8x64xi1> to vector<8x64xi32>
    %5 = arith.sitofp %4 : vector<8x64xi32> to vector<8x64xf32>
    %c0_1 = arith.constant 0 : index
    %c0_2 = arith.constant 0 : index
    %6 = vector.load %arg2[%c0_1, %c0_2] : memref<64x128xf32, #tpu.memory_space<vmem>>, vector<64x128xf32>
    %cst = arith.constant dense<0.000000e+00> : vector<8x128xf32>
    %7 = tpu.matmul %5, %6, %cst {dimension_numbers = #tpu.dot_dimension_numbers<[1], [0], [0], [1], [0, 0, 1, 1], [], []>} : vector<8x64xf32>, vector<64x128xf32>, vector<8x128xf32> -> vector<8x128xf32>
    %cst_3 = arith.constant 11.3137083 : f32
    %8 = vector.broadcast %cst_3 : f32 to vector<8x128xf32>
    %9 = arith.mulf %7, %8 : vector<8x128xf32>
    %c0_4 = arith.constant 0 : index
    %c0_5 = arith.constant 0 : index
    %10 = vector.load %arg3[%c0_4, %c0_5] : memref<8x128xf32, #tpu.memory_space<vmem>>, vector<8x128xf32>
    tpu.vector_store %arg3[%c0_4, %c0_5], %9 {strides = array<i32>} : memref<8x128xf32, #tpu.memory_space<vmem>>, vector<8x128xf32>,
    return
  }
  func.func @transform_0(%arg0: i32) -> (i32, i32) {
    %c0_i32 = arith.constant 0 : i32
    %c0_i32_0 = arith.constant 0 : i32
    return %arg0, %c0_i32 : i32, i32
  }
  func.func @transform_1(%arg0: i32) -> (i32, i32) {
    %c0_i32 = arith.constant 0 : i32
    %c0_i32_0 = arith.constant 0 : i32
    %c0_i32_1 = arith.constant 0 : i32
    return %c0_i32, %c0_i32_0 : i32, i32
  }
  func.func @transform_2(%arg0: i32) -> (i32, i32) {
    %c0_i32 = arith.constant 0 : i32
    %c0_i32_0 = arith.constant 0 : i32
    return %arg0, %c0_i32 : i32, i32
  }
}

</mosaic_0001>

<llo_original>
// kernel: tpu_custom_call.1
$region0: #{tpu_custom_call.1}
  #allocation0 [shape = 'u32[]', space=smem, size = 0x4, offset = 0x4, fixed_abs, tag = 'smem constant byte address 0x4 - core index']
  #allocation1 [shape = 'u32[72,128]{1,0:T(1,128)}', space=vmem, size = 0x9000, scoped, tag = 'internal scratch']
  %s0 = inlined_call_operand.vmem [shape: s32[16,1], index: 0, kind: input, shape index: {}]
  %s1 = inlined_call_operand.hbm [shape: f32[64,128], index: 1, kind: input, shape index: {}]
  %s2 = inlined_call_operand.hbm [shape: f32[16,128], index: 2, kind: output, shape index: {}]
  %s3 = sld [smem:[#allocation0]]
  $region45: #{tpu_custom_call.1} parent=0
    _
  %s5 = ssub.s32 1, %s3
  %s6 = scalar_select 0, %s5, %s3
  $region1: #{tpu_custom_call.1} parent=0
    #allocation2 [shape = 'u8[32768]{0}', space=vmem, size = 0x8000, scoped, tag = 'input window, operand 1, single buffered']
    #allocation3 [shape = 's32[2]{0}', space=sflag, size = 0x8, scoped, tag = 'scoped memory for tpu_custom_call.1']
    #allocation4 [shape = 's32[2]{0}', space=sflag, size = 0x8, scoped, tag = 'scoped memory for tpu_custom_call.1']
    #allocation5 [shape = 'u8[8192]{0}', space=vmem, size = 0x2000, scoped, tag = 'output window, operand 0']
    %7 = vsyncpa [#allocation3], 0
    %8 = vsyncpa [#allocation4], 0
    %s9 = scalar_lea.sflag [#allocation4], 1
    %10 = vsyncpa %s9, 0
    loop: start=0, step=1, limit=4
    $region2: #{tpu_custom_call.1} parent=1 // loop_pre_header
      _
    $region3: #{tpu_custom_call.1} parent=1 // loop_header
      %s12 = sphi 0, %s16
      %p13 = scmp.ge.s32.totalorder %s12, 4
      %s22 = sphi 0, %s24
      %s25 = sphi 0, %s22
      %s26 = sphi 0, %s25
      %s42 = sphi 0, %s26
      %s46 = sphi 0, %s46
      %s48 = sphi 0, %s46
      %s49 = sphi 0, %s48
      %s63 = sphi 0, %s49
      %s69 = sphi 0, %s71
      %s72 = sphi 0, %s69
      %s73 = sphi 0, %s72
      %s89 = sphi 0, %s73
    $region4: #{tpu_custom_call.1} parent=1 // loop_header_branch
      %15 = sbr.rel (%p13) target = $region8
    $region5: #{tpu_custom_call.1} parent=1 // loop_body
      %s17 = ssub.s32 %s12, 1
      %s18 = ssub.s32 %s12, 2
      %s19 = sadd.s32 %s12, 1
      %s20 = ssub.s32 %s12, %s19
      %p21 = scmp.eq.s32.totalorder %s20, 0
      %s23 = sadd.s32 %s22, 1
      %s24 = scalar_select %p21, %s22, %s23
      %p27 = pneg %p21
      %p28 = scmp.eq.s32.totalorder %s12, 1
      %p29 = por %p27, %p28
      %p30 = scmp.ne.s32.totalorder %s22, %s25
      %p31 = scmp.eq.s32.totalorder %s12, 0
      %p32 = por %p30, %p31
      %p33 = scmp.ne.s32.totalorder %s22, %s25
      %p34 = scmp.eq.s32.totalorder %s17, 1
      %p35 = por %p33, %p34
      %p36 = scmp.ne.s32.totalorder %s25, %s26
      %p37 = scmp.eq.s32.totalorder %s17, 0
      %p38 = por %p36, %p37
      %p39 = scmp.ne.s32.totalorder %s25, %s26
      %p40 = scmp.eq.s32.totalorder %s18, 1
      %p41 = por %p39, %p40
      %p43 = scmp.ne.s32.totalorder %s26, %s42
      %p44 = scmp.eq.s32.totalorder %s18, 0
      %p45 = por %p43, %p44
      %s47 = sadd.s32 %s46, 1
      %p50 = scmp.eq.s32.totalorder %s12, 1
      %p51 = scmp.ne.s32.totalorder %s46, %s48
      %p52 = scmp.eq.s32.totalorder %s12, 0
      %p53 = por %p51, %p52
      %p54 = scmp.ne.s32.totalorder %s46, %s48
      %p55 = scmp.eq.s32.totalorder %s17, 1
      %p56 = por %p54, %p55
      %p57 = scmp.ne.s32.totalorder %s48, %s49
      %p58 = scmp.eq.s32.totalorder %s17, 0
      %p59 = por %p57, %p58
      %p60 = scmp.ne.s32.totalorder %s48, %s49
      %p61 = scmp.eq.s32.totalorder %s18, 1
      %p62 = por %p60, %p61
      %p64 = scmp.ne.s32.totalorder %s49, %s63
      %p65 = scmp.eq.s32.totalorder %s18, 0
      %p66 = por %p64, %p65
      %s67 = ssub.s32 %s12, %s19
      %p68 = scmp.eq.s32.totalorder %s67, 0
      %s70 = sadd.s32 %s69, 1
      %s71 = scalar_select %p68, %s69, %s70
      %p74 = pneg %p68
      %p75 = scmp.eq.s32.totalorder %s12, 1
      %p76 = por %p74, %p75
      %p77 = scmp.ne.s32.totalorder %s69, %s72
      %p78 = scmp.eq.s32.totalorder %s12, 0
      %p79 = por %p77, %p78
      %p80 = scmp.ne.s32.totalorder %s69, %s72
      %p81 = scmp.eq.s32.totalorder %s17, 1
      %p82 = por %p80, %p81
      %p83 = scmp.ne.s32.totalorder %s72, %s73
      %p84 = scmp.eq.s32.totalorder %s17, 0
      %p85 = por %p83, %p84
      %p86 = scmp.ne.s32.totalorder %s72, %s73
      %p87 = scmp.eq.s32.totalorder %s18, 1
      %p88 = por %p86, %p87
      %p90 = scmp.ne.s32.totalorder %s73, %s89
      %p91 = scmp.eq.s32.totalorder %s18, 0
      %p92 = por %p90, %p91
      %p93 = scmp.le.s32.totalorder 1, %s12
      %p94 = scmp.lt.s32.totalorder %s12, 3
      %p95 = pnand %p93, %p94
      %p96 = pneg %p95
      // Predicated region
      $region9: #{tpu_custom_call.1} parent=5 // pred_check
        _
      $region10: #{tpu_custom_call.1} parent=5 // pred_check_branch
        %98 = sbr.rel (%p95) target = $region12
      $region11: #{tpu_custom_call.1} parent=5 // pred_region
        %s99 = ssub.s32 %s12, 1
        // Predicated region
        $region13: #{tpu_custom_call.1} parent=11 // pred_check
          %p100 = pneg %p59
        $region14: #{tpu_custom_call.1} parent=11 // pred_check_branch
          %102 = sbr.rel (%p100) target = $region16
        $region15: #{tpu_custom_call.1} parent=11 // pred_region
          %104 = vsyncadd [#allocation3], 0
          %s105 = sshll.u32 %s1, 4
          %s106 = int_to_ptr.hbm [resolvable:$true] %s105
          %s107 = sshll.u32 [#allocation2], 4
          %s108 = int_to_ptr.vmem [resolvable:$true] %s107
          %113 = dma.hbm_to_vmem [thread:$0]  %s106, 1024, %s108, [#allocation3], 128, 128, 8
        $region16: #{tpu_custom_call.1} parent=11 // pred_fallthru
          _
      $region12: #{tpu_custom_call.1} parent=5 // pred_fallthru
        _
      %p114 = scmp.lt.s32.totalorder %s12, 2
      // Predicated region
      $region17: #{tpu_custom_call.1} parent=5 // pred_check
        %p115 = pneg %p114
      $region18: #{tpu_custom_call.1} parent=5 // pred_check_branch
        %117 = sbr.rel (%p115) target = $region20
      $region19: #{tpu_custom_call.1} parent=5 // pred_region
        // Predicated region
        $region21: #{tpu_custom_call.1} parent=19 // pred_check
          %p118 = pneg %p32
        $region22: #{tpu_custom_call.1} parent=19 // pred_check_branch
          %120 = sbr.rel (%p118) target = $region24
        $region23: #{tpu_custom_call.1} parent=19 // pred_region
          %p121 = scmp.lt.s32.totalorder %s12, 1
          %s122 = scalar_select %p121, %s12, 1
          %s123 = smul.addr %s122, 8
          %s124 = scalar_lea.vmem %s0, %s123
        $region24: #{tpu_custom_call.1} parent=19 // pred_fallthru
          _
      $region20: #{tpu_custom_call.1} parent=5 // pred_fallthru
        _
      %p125 = scmp.le.s32.totalorder 1, %s12
      %p126 = scmp.lt.s32.totalorder %s12, 3
      %p127 = pnand %p125, %p126
      %p128 = pneg %p127
      // Predicated region
      $region25: #{tpu_custom_call.1} parent=5 // pred_check
        _
      $region26: #{tpu_custom_call.1} parent=5 // pred_check_branch
        %130 = sbr.rel (%p127) target = $region28
      $region27: #{tpu_custom_call.1} parent=5 // pred_region
        %s131 = ssub.s32 %s12, 1
        // Predicated region
        $region29: #{tpu_custom_call.1} parent=27 // pred_check
          %p132 = pneg %p59
        $region30: #{tpu_custom_call.1} parent=27 // pred_check_branch
          %134 = sbr.rel (%p132) target = $region32
        $region31: #{tpu_custom_call.1} parent=27 // pred_region
          %136 = dma.done [#allocation3], 1024
        $region32: #{tpu_custom_call.1} parent=27 // pred_fallthru
          _
        %p137 = scmp.lt.s32.totalorder %s17, 1
        %s138 = scalar_select %p137, %s17, 1
        %s139 = smul.addr %s138, 8
        %s140 = scalar_lea.vmem %s0, %s139
        %p141 = pneg %p38
        %p142 = pneg %p35
        %p143 = pneg %p59
        %p144 = pneg %p56
        %p145 = pneg %p85
        %p146 = pneg %p82
        %s147 = sand.u32 %s72, 1
        %s148 = scalar_lea.sflag [#allocation4], %s147
        %s149 = sand.u32 %s72, 1
        %s150 = smul.addr %s149, 8
        %s151 = scalar_lea.vmem [#allocation5], %s150
        %p152 = scmp.lt.s32.totalorder %s17, 1
        %s153 = scalar_select %p152, %s17, 1
        %s154 = smul.addr %s153, 8
        %s155 = scalar_lea.vmem %s0, %s154
        %v156 = vld [vmem:[%s155] sm:$0xff]
        %v157 = vlaneseq
        %v158 = vand.u32 %v157, 127
        %159 = vset.pattern.permute.xlu0 0
        %160 = vperm.xlu0 %159, %v156
        %v161 = vpop.permute.xlu0 %160
        %vm162 = vcmp.eq.s32.totalorder %v161, %v158
        %v163 = vsel %vm162, 1, 0
        %v164 = vcvt.s32.f32 %v163
        %v165 = vld [vmem:[#allocation2] sm:$0xff]
        %v166 = vld [vmem:[#allocation2 + $0x8] sm:$0xff]
        %v167 = vld [vmem:[#allocation2 + $0x10] sm:$0xff]
        %v168 = vld [vmem:[#allocation2 + $0x18] sm:$0xff]
        %v169 = vld [vmem:[#allocation2 + $0x20] sm:$0xff]
        %v170 = vld [vmem:[#allocation2 + $0x28] sm:$0xff]
        %v171 = vld [vmem:[#allocation2 + $0x30] sm:$0xff]
        %v172 = vld [vmem:[#allocation2 + $0x38] sm:$0xff]
        %vm173 = vcmask 523264
        %v175 = vsel %vm173, %v164, 0
        %177 = vmatpush.msra.mxu0 0.0
        %178 = vmatpush.msra.mxu0 0.0
        %179 = vmatpush.msra.mxu0 0.0
        %180 = vmatpush.msra.mxu0 0.0
        %181 = vmatpush.msra.mxu0 0.0
        %182 = vmatpush.msra.mxu0 0.0
        %183 = vmatpush.msra.mxu0 0.0
        %184 = vmatpush.msra.mxu0 0.0
        %185 = vmatpush.msra.mxu0 %v172
        %186 = vmatpush.msra.mxu0 %v171
        %187 = vmatpush.msra.mxu0 %v170
        %188 = vmatpush.msra.mxu0 %v169
        %189 = vmatpush.msra.mxu0 %v168
        %190 = vmatpush.msra.mxu0 %v167
        %191 = vmatpush.msra.mxu0 %v166
        %192 = vmatpush.msra.mxu0 %v165
        %193 = vmatmul.f32.gmra.mxu0 %v175
        %v194 = vpop.f32.mrf.mxu0
        %v195 = vadd.f32 0.0, %v194
        %196 = vdwg.mxu0
        %v197 = vmul.f32 %v195, 11.313708
        %198 = vst [vmem:[%s151] sm:$0xff] %v197
        %s199 = sand.u32 %s72, 1
        %s200 = scalar_lea.sflag [#allocation4], %s199
        %s201 = sand.u32 %s72, 1
        %s202 = smul.addr %s201, 8
        %s203 = scalar_lea.vmem [#allocation5], %s202
        // Predicated region
        $region33: #{tpu_custom_call.1} parent=27 // pred_check
          %p204 = pneg %p82
        $region34: #{tpu_custom_call.1} parent=27 // pred_check_branch
          %206 = sbr.rel (%p204) target = $region36
        $region35: #{tpu_custom_call.1} parent=27 // pred_region
          %208 = vsyncadd %s200, 0
          %s209 = smul.addr %s17, 8
          %s210 = scalar_lea.hbm %s2, %s209
          %s212 = sshll.u32 %s203, 4
          %s213 = int_to_ptr.vmem [resolvable:$true] %s212
          %s214 = sshll.u32 %s210, 4
          %s215 = int_to_ptr.hbm [resolvable:$true] %s214
          %217 = dma.vmem_to_hbm [thread:$0]  %s213, 128, %s215, %s200
        $region36: #{tpu_custom_call.1} parent=27 // pred_fallthru
          _
      $region28: #{tpu_custom_call.1} parent=5 // pred_fallthru
        _
      %p218 = scmp.le.s32.totalorder 2, %s12
      // Predicated region
      $region37: #{tpu_custom_call.1} parent=5 // pred_check
        %p219 = pneg %p218
      $region38: #{tpu_custom_call.1} parent=5 // pred_check_branch
        %221 = sbr.rel (%p219) target = $region40
      $region39: #{tpu_custom_call.1} parent=5 // pred_region
        %s222 = ssub.s32 %s12, 2
        // Predicated region
        $region41: #{tpu_custom_call.1} parent=39 // pred_check
          %p223 = pneg %p88
        $region42: #{tpu_custom_call.1} parent=39 // pred_check_branch
          %225 = sbr.rel (%p223) target = $region44
        $region43: #{tpu_custom_call.1} parent=39 // pred_region
          %s226 = sand.u32 %s73, 1
          %s227 = scalar_lea.sflag [#allocation4], %s226
          %s228 = sand.u32 %s73, 1
          %s229 = smul.addr %s228, 8
          %s230 = scalar_lea.vmem [#allocation5], %s229
          %232 = dma.done %s227, 128
        $region44: #{tpu_custom_call.1} parent=39 // pred_fallthru
          _
      $region40: #{tpu_custom_call.1} parent=5 // pred_fallthru
        _
    $region6: #{tpu_custom_call.1} parent=1 // loop_footer
      %s16 = sadd.s32 1, %s12
    $region7: #{tpu_custom_call.1} parent=1 // loop_footer_branch
      %11 = sbr.rel target = $region3
    $region8: #{tpu_custom_call.1} parent=1 // loop_exit
      _
    %233 = vsyncpa [#allocation3], 1
    %s234 = scalar_lea.sflag [#allocation3], 1
    %235 = vsyncpa %s234, 1
    %236 = vsyncpa [#allocation4], 1
    %s237 = scalar_lea.sflag [#allocation4], 1
    %238 = vsyncpa %s237, 1

</llo_original>
